<compile_context>
chip_gen: v7x
topology: tpu7x:2x2x1
jax: 0.10.0
libtpu: 0.0.40
codegen_flags: <defaults>
</compile_context>

<pallas_src>
import functools

import jax
import jax.numpy as jnp
from jax import lax
from jax.experimental import pallas as pl
from jax.experimental.pallas import tpu as pltpu


def _lambda_kernel(s_ref, x_ref, o_ref, *, pad, flatten_m):
    # s_ref: (HW, HW_out)          fused stride-2 selection matrix (one-hot cols)
    # x_ref: (B_blk, C, HW)        lane-dense input block
    # o_ref: (B_blk, C_out, HW_out) output block, C_out = C + 2*pad
    b_blk, c, hw = x_ref.shape
    _, c_out, hw_out = o_ref.shape

    x = x_ref[...]
    s = s_ref[...]

    # Each column of S is one-hot, so an f32-accumulated matmul returns the
    # selected x element exactly.  For f32 inputs force HIGHEST so the MXU
    # does not truncate x to a single bf16 pass; bf16 inputs are single-pass.
    prec = (lax.Precision.HIGHEST if x.dtype == jnp.float32
            else lax.Precision.DEFAULT)

    if flatten_m:
        # One big (B_blk*C, HW) x (HW, HW_out) matmul keeps the MXU rows full.
        # The merge/split reshapes only touch the sublane dim in multiples of
        # the native tile (guaranteed by the wrapper), so they are layout-free.
        sub = lax.dot_general(
            x.reshape(b_blk * c, hw), s,
            (((1,), (0,)), ((), ())),
            precision=prec, preferred_element_type=jnp.float32,
        ).reshape(b_blk, c, hw_out)
    else:
        # Fallback (C not sublane-tile aligned): 3-D contraction, as in the
        # previously validated kernel.
        sub = lax.dot_general(
            x, s, (((2,), (0,)), ((), ())),
            precision=prec, preferred_element_type=jnp.float32)

    # Zero only the pad slabs; store the subsampled channels once.
    if pad > 0:
        zpad = jnp.zeros((b_blk, pad, hw_out), o_ref.dtype)
        o_ref[:, :pad, :] = zpad
        o_ref[:, pad + c:, :] = zpad
    o_ref[:, pad:pad + c, :] = sub.astype(o_ref.dtype)


def lambda_layer(x, planes):
    """ResNet option-A shortcut lambda: x[:, :, ::2, ::2] + channel zero-pad.

    Only even H/W is supported (PyTorch ::2 on odd dims gives ceil(H/2), which
    CIFAR ResNets never hit).  Floating dtypes only (selection runs on the MXU).
    """
    b, c, h, w = x.shape
    assert h % 2 == 0 and w % 2 == 0, "even spatial dims required"
    assert jnp.issubdtype(x.dtype, jnp.floating), "floating dtype required"

    pad = planes // 4
    h_out, w_out = h // 2, w // 2
    c_out = c + 2 * pad
    hw, hw_out = h * w, h_out * w_out
    itemsize = jnp.dtype(x.dtype).itemsize

    # Fused (H*W -> H_out*W_out) stride-2 selection matrix, built once outside
    # the kernel:  S[h*W + w, p*W_out + q] = 1  iff  h == 2p and w == 2q.
    row = jnp.arange(hw)
    col = jnp.arange(hw_out)
    sel = ((row[:, None] // w == 2 * (col[None, :] // w_out)) &
           (row[:, None] % w == 2 * (col[None, :] % w_out)))
    s = sel.astype(x.dtype)                    # (HW, HW_out), one-hot columns

    # Lane-dense layout: flatten spatial dims so the last dim is HW / HW_out.
    x_flat = x.reshape(b, c, hw)

    # ---------- generation-aware blocking --------------------------------
    kind = ""
    try:
        kind = jax.devices()[0].device_kind.lower()
    except Exception:  # pragma: no cover - be robust to exotic backends
        pass
    single_tc = ("v5e" in kind or "v5 lite" in kind or "v5lite" in kind
                 or "v6" in kind)
    if single_tc:                    # v5e / v6e: 1 TensorCore, 128 MiB VMEM
        tile_target = 8 * 1024 * 1024
        min_steps = 1
        vmem_budget = 96 * 1024 * 1024
    else:                            # v7x / unknown: 2 TCs, 64 MiB VMEM
        tile_target = 4 * 1024 * 1024
        min_steps = 4                # give both TensorCores >= 2 steps each
        vmem_budget = 24 * 1024 * 1024

    in_bytes_img = c * hw * itemsize
    out_bytes_img = c_out * hw_out * itemsize
    s_bytes = hw * hw_out * itemsize

    b_blk = max(1, min(b, tile_target // max(1, in_bytes_img)))
    b_blk = max(1, min(b_blk, pl.cdiv(b, min_steps)))
    # Keep double-buffered in+out plus the resident S inside the VMEM budget.
    while b_blk > 1 and (2 * b_blk * (in_bytes_img + out_bytes_img)
                         + 2 * s_bytes) > vmem_budget:
        b_blk = (b_blk + 1) // 2
    grid = (pl.cdiv(b, b_blk),)      # partial last block is masked by Pallas

    vmem_need = (2 * b_blk * (in_bytes_img + out_bytes_img)
                 + 2 * s_bytes + (2 << 20))
    vmem_limit = int(vmem_need) if vmem_need > (32 << 20) else None

    # Flatten (b_blk, C) into one M dim only when it is a layout-free reshape
    # (C a multiple of the sublane tile for this dtype: 8 f32, 16 bf16).
    sublane_tile = max(1, 32 // itemsize)
    flatten_m = (c % sublane_tile == 0)

    kernel = functools.partial(_lambda_kernel, pad=pad, flatten_m=flatten_m)

    out_flat = pl.pallas_call(
        kernel,
        out_shape=jax.ShapeDtypeStruct((b, c_out, hw_out), x.dtype),
        grid_spec=pltpu.PrefetchScalarGridSpec(
            num_scalar_prefetch=0,
            grid=grid,
            in_specs=[
                # Selection matrix: same full block every step (stays in VMEM).
                pl.BlockSpec((hw, hw_out), lambda i: (0, 0)),
                # Batch-blocked, lane-dense input.
                pl.BlockSpec((b_blk, c, hw), lambda i: (i, 0, 0)),
            ],
            out_specs=pl.BlockSpec((b_blk, c_out, hw_out),
                                   lambda i: (i, 0, 0)),
        ),
        compiler_params=pltpu.CompilerParams(
            dimension_semantics=("parallel",),
            vmem_limit_bytes=vmem_limit),
    )(s, x_flat)

    return out_flat.reshape(b, c_out, h_out, w_out)


if __name__ == "__main__":
    key = jax.random.PRNGKey(0)
    # Canonical CIFAR-ResNet option-A shortcut shapes, kept small:
    # 16 -> 32 channels, 16x16 -> 8x8 spatial.
    B, C, H, W = 2, 16, 16, 16
    planes = 32                      # pad = planes // 4 = 8, C_out = 32
    x = jax.random.normal(key, (B, C, H, W), dtype=jnp.float32)

    out = jax.block_until_ready(lambda_layer(x, planes))

    # Plain-JAX reference of the same lambda (semantics of the PyTorch forward).
    pad = planes // 4
    ref = jnp.pad(x[:, :, ::2, ::2], ((0, 0), (pad, pad), (0, 0), (0, 0)))
    assert out.shape == ref.shape and out.dtype == ref.dtype
    assert jnp.allclose(out, ref, atol=1e-6), "mismatch vs reference"

    print("KERNEL_OK")
</pallas_src>

<mosaic_0001>
module attributes {stable_mosaic.version = 11 : i64} {
  func.func @_lambda_kernel(%arg0: i32, %arg1: memref<256x64xf32, #tpu.memory_space<vmem>>, %arg2: memref<1x16x256xf32, #tpu.memory_space<vmem>>, %arg3: memref<1x32x64xf32, #tpu.memory_space<vmem>>) attributes {dimension_semantics = [#tpu.dimension_semantics<parallel>], iteration_bounds = array<i64: 2>, scalar_prefetch = 0 : i64, scratch_operands = 0 : i64, tpu.core_type = #tpu.core_type<tc>, window_params = [{pipeline_mode = #tpu.pipeline_mode<synchronous>, transform_indices = @transform_0, window_bounds = array<i64: 256, 64>}, {transform_indices = @transform_1, window_bounds = array<i64: 1, 16, 256>}, {transform_indices = @transform_2, window_bounds = array<i64: 1, 32, 64>}]} {
    %c0 = arith.constant 0 : index
    %c0_0 = arith.constant 0 : index
    %c0_1 = arith.constant 0 : index
    %0 = vector.load %arg2[%c0, %c0_0, %c0_1] : memref<1x16x256xf32, #tpu.memory_space<vmem>>, vector<1x16x256xf32>
    %c0_2 = arith.constant 0 : index
    %c0_3 = arith.constant 0 : index
    %1 = vector.load %arg1[%c0_2, %c0_3] : memref<256x64xf32, #tpu.memory_space<vmem>>, vector<256x64xf32>
    %2 = vector.shape_cast %0 : vector<1x16x256xf32> to vector<16x256xf32>
    %cst = arith.constant dense<0.000000e+00> : vector<16x64xf32>
    %3 = tpu.matmul %2, %1, %cst {dimension_numbers = #tpu.dot_dimension_numbers<[1], [0], [0], [1], [0, 0, 1, 1], [], []>, precision = #tpu.contract_precision<fp32>} : vector<16x256xf32>, vector<256x64xf32>, vector<16x64xf32> -> vector<16x64xf32>
    %4 = vector.shape_cast %3 : vector<16x64xf32> to vector<1x16x64xf32>
    %cst_4 = arith.constant 0.000000e+00 : f32
    %5 = vector.broadcast %cst_4 : f32 to vector<1x8x64xf32>
    %c0_5 = arith.constant 0 : index
    %c0_6 = arith.constant 0 : index
    %c0_7 = arith.constant 0 : index
    %6 = vector.load %arg3[%c0_5, %c0_6, %c0_7] : memref<1x32x64xf32, #tpu.memory_space<vmem>>, vector<1x8x64xf32>
    tpu.vector_store %arg3[%c0_5, %c0_6, %c0_7], %5 {strides = array<i32>} : memref<1x32x64xf32, #tpu.memory_space<vmem>>, vector<1x8x64xf32>,
    %c0_8 = arith.constant 0 : index
    %c24 = arith.constant 24 : index
    %c0_9 = arith.constant 0 : index
    %7 = vector.load %arg3[%c0_8, %c24, %c0_9] : memref<1x32x64xf32, #tpu.memory_space<vmem>>, vector<1x8x64xf32>
    tpu.vector_store %arg3[%c0_8, %c24, %c0_9], %5 {strides = array<i32>} : memref<1x32x64xf32, #tpu.memory_space<vmem>>, vector<1x8x64xf32>,
    %c0_10 = arith.constant 0 : index
    %c8 = arith.constant 8 : index
    %c0_11 = arith.constant 0 : index
    %8 = vector.load %arg3[%c0_10, %c8, %c0_11] : memref<1x32x64xf32, #tpu.memory_space<vmem>>, vector<1x16x64xf32>
    tpu.vector_store %arg3[%c0_10, %c8, %c0_11], %4 {strides = array<i32>} : memref<1x32x64xf32, #tpu.memory_space<vmem>>, vector<1x16x64xf32>,
    return
  }
  func.func @transform_0(%arg0: i32) -> (i32, i32) {
    %c0_i32 = arith.constant 0 : i32
    %c0_i32_0 = arith.constant 0 : i32
    %c0_i32_1 = arith.constant 0 : i32
    return %c0_i32, %c0_i32_0 : i32, i32
  }
  func.func @transform_1(%arg0: i32) -> (i32, i32, i32) {
    %c0_i32 = arith.constant 0 : i32
    %c0_i32_0 = arith.constant 0 : i32
    %c0_i32_1 = arith.constant 0 : i32
    return %arg0, %c0_i32, %c0_i32_0 : i32, i32, i32
  }
  func.func @transform_2(%arg0: i32) -> (i32, i32, i32) {
    %c0_i32 = arith.constant 0 : i32
    %c0_i32_0 = arith.constant 0 : i32
    %c0_i32_1 = arith.constant 0 : i32
    return %arg0, %c0_i32, %c0_i32_0 : i32, i32, i32
  }
}

</mosaic_0001>

<llo_original>
// kernel: tpu_custom_call.1
$region0: #{tpu_custom_call.1}
  #allocation0 [shape = 'u32[]', space=smem, size = 0x4, offset = 0x4, fixed_abs, tag = 'smem constant byte address 0x4 - core index']
  #allocation1 [shape = 'u32[144,128]{1,0:T(1,128)}', space=vmem, size = 0x12000, scoped, tag = 'internal scratch']
  %s0 = inlined_call_operand.vmem [shape: f32[256,64], index: 0, kind: input, shape index: {}]
  %s1 = inlined_call_operand.vmem [shape: f32[2,16,256], index: 1, kind: input, shape index: {}]
  %s2 = inlined_call_operand.hbm [shape: f32[2,32,64], index: 2, kind: output, shape index: {}]
  %s3 = sld [smem:[#allocation0]]
  $region41: #{tpu_custom_call.1} parent=0
    _
  %s5 = ssub.s32 1, %s3
  %s6 = scalar_select 0, %s5, %s3
  $region1: #{tpu_custom_call.1} parent=0
    #allocation2 [shape = 'u8[32768]{0}', space=vmem, size = 0x8000, scoped, tag = 'output window, operand 0']
    #allocation3 [shape = 's32[2]{0}', space=sflag, size = 0x8, scoped, tag = 'scoped memory for tpu_custom_call.1']
    %7 = vsyncpa [#allocation3], 0
    %s8 = scalar_lea.sflag [#allocation3], 1
    %9 = vsyncpa %s8, 0
    loop: start=0, step=1, limit=4
    $region2: #{tpu_custom_call.1} parent=1 // loop_pre_header
      _
    $region3: #{tpu_custom_call.1} parent=1 // loop_header
      %s11 = sphi 0, %s15
      %p12 = scmp.ge.s32.totalorder %s11, 4
      %s19 = sphi 0, %s19
      %s21 = sphi 0, %s19
      %s22 = sphi 0, %s21
      %s36 = sphi 0, %s22
      %s42 = sphi 0, %s44
      %s45 = sphi 0, %s42
      %s46 = sphi 0, %s45
      %s62 = sphi 0, %s46
      %s68 = sphi 0, %s70
      %s71 = sphi 0, %s68
      %s72 = sphi 0, %s71
      %s88 = sphi 0, %s72
    $region4: #{tpu_custom_call.1} parent=1 // loop_header_branch
      %14 = sbr.rel (%p12) target = $region8
    $region5: #{tpu_custom_call.1} parent=1 // loop_body
      %s16 = ssub.s32 %s11, 1
      %s17 = ssub.s32 %s11, 2
      %s18 = sadd.s32 %s11, 1
      %s20 = sadd.s32 %s19, 1
      %p23 = scmp.eq.s32.totalorder %s11, 1
      %p24 = scmp.ne.s32.totalorder %s19, %s21
      %p25 = scmp.eq.s32.totalorder %s11, 0
      %p26 = por %p24, %p25
      %p27 = scmp.ne.s32.totalorder %s19, %s21
      %p28 = scmp.eq.s32.totalorder %s16, 1
      %p29 = por %p27, %p28
      %p30 = scmp.ne.s32.totalorder %s21, %s22
      %p31 = scmp.eq.s32.totalorder %s16, 0
      %p32 = por %p30, %p31
      %p33 = scmp.ne.s32.totalorder %s21, %s22
      %p34 = scmp.eq.s32.totalorder %s17, 1
      %p35 = por %p33, %p34
      %p37 = scmp.ne.s32.totalorder %s22, %s36
      %p38 = scmp.eq.s32.totalorder %s17, 0
      %p39 = por %p37, %p38
      %s40 = ssub.s32 %s11, %s18
      %p41 = scmp.eq.s32.totalorder %s40, 0
      %s43 = sadd.s32 %s42, 1
      %s44 = scalar_select %p41, %s42, %s43
      %p47 = pneg %p41
      %p48 = scmp.eq.s32.totalorder %s11, 1
      %p49 = por %p47, %p48
      %p50 = scmp.ne.s32.totalorder %s42, %s45
      %p51 = scmp.eq.s32.totalorder %s11, 0
      %p52 = por %p50, %p51
      %p53 = scmp.ne.s32.totalorder %s42, %s45
      %p54 = scmp.eq.s32.totalorder %s16, 1
      %p55 = por %p53, %p54
      %p56 = scmp.ne.s32.totalorder %s45, %s46
      %p57 = scmp.eq.s32.totalorder %s16, 0
      %p58 = por %p56, %p57
      %p59 = scmp.ne.s32.totalorder %s45, %s46
      %p60 = scmp.eq.s32.totalorder %s17, 1
      %p61 = por %p59, %p60
      %p63 = scmp.ne.s32.totalorder %s46, %s62
      %p64 = scmp.eq.s32.totalorder %s17, 0
      %p65 = por %p63, %p64
      %s66 = ssub.s32 %s11, %s18
      %p67 = scmp.eq.s32.totalorder %s66, 0
      %s69 = sadd.s32 %s68, 1
      %s70 = scalar_select %p67, %s68, %s69
      %p73 = pneg %p67
      %p74 = scmp.eq.s32.totalorder %s11, 1
      %p75 = por %p73, %p74
      %p76 = scmp.ne.s32.totalorder %s68, %s71
      %p77 = scmp.eq.s32.totalorder %s11, 0
      %p78 = por %p76, %p77
      %p79 = scmp.ne.s32.totalorder %s68, %s71
      %p80 = scmp.eq.s32.totalorder %s16, 1
      %p81 = por %p79, %p80
      %p82 = scmp.ne.s32.totalorder %s71, %s72
      %p83 = scmp.eq.s32.totalorder %s16, 0
      %p84 = por %p82, %p83
      %p85 = scmp.ne.s32.totalorder %s71, %s72
      %p86 = scmp.eq.s32.totalorder %s17, 1
      %p87 = por %p85, %p86
      %p89 = scmp.ne.s32.totalorder %s72, %s88
      %p90 = scmp.eq.s32.totalorder %s17, 0
      %p91 = por %p89, %p90
      %p92 = scmp.le.s32.totalorder 1, %s11
      %p93 = scmp.lt.s32.totalorder %s11, 3
      %p94 = pnand %p92, %p93
      %p95 = pneg %p94
      // Predicated region
      $region9: #{tpu_custom_call.1} parent=5 // pred_check
        _
      $region10: #{tpu_custom_call.1} parent=5 // pred_check_branch
        %97 = sbr.rel (%p94) target = $region12
      $region11: #{tpu_custom_call.1} parent=5 // pred_region
        %s98 = ssub.s32 %s11, 1
        // Predicated region
        $region13: #{tpu_custom_call.1} parent=11 // pred_check
          %p99 = pneg %p32
        $region14: #{tpu_custom_call.1} parent=11 // pred_check_branch
          %101 = sbr.rel (%p99) target = $region16
        $region15: #{tpu_custom_call.1} parent=11 // pred_region
          _
        $region16: #{tpu_custom_call.1} parent=11 // pred_fallthru
          _
      $region12: #{tpu_custom_call.1} parent=5 // pred_fallthru
        _
      %p102 = scmp.lt.s32.totalorder %s11, 2
      // Predicated region
      $region17: #{tpu_custom_call.1} parent=5 // pred_check
        %p103 = pneg %p102
      $region18: #{tpu_custom_call.1} parent=5 // pred_check_branch
        %105 = sbr.rel (%p103) target = $region20
      $region19: #{tpu_custom_call.1} parent=5 // pred_region
        // Predicated region
        $region21: #{tpu_custom_call.1} parent=19 // pred_check
          %p106 = pneg %p52
        $region22: #{tpu_custom_call.1} parent=19 // pred_check_branch
          %108 = sbr.rel (%p106) target = $region24
        $region23: #{tpu_custom_call.1} parent=19 // pred_region
          %p109 = scmp.lt.s32.totalorder %s11, 1
          %s110 = scalar_select %p109, %s11, 1
          %s111 = smul.addr %s110, 4
          %s112 = smul.addr %s111, 8
          %s113 = scalar_lea.vmem %s1, %s112
        $region24: #{tpu_custom_call.1} parent=19 // pred_fallthru
          _
      $region20: #{tpu_custom_call.1} parent=5 // pred_fallthru
        _
      %p114 = scmp.le.s32.totalorder 1, %s11
      %p115 = scmp.lt.s32.totalorder %s11, 3
      %p116 = pnand %p114, %p115
      %p117 = pneg %p116
      // Predicated region
      $region25: #{tpu_custom_call.1} parent=5 // pred_check
        _
      $region26: #{tpu_custom_call.1} parent=5 // pred_check_branch
        %119 = sbr.rel (%p116) target = $region28
      $region27: #{tpu_custom_call.1} parent=5 // pred_region
        %s120 = ssub.s32 %s11, 1
        %p121 = pneg %p32
        %p122 = pneg %p29
        %p123 = scmp.lt.s32.totalorder %s16, 1
        %s124 = scalar_select %p123, %s16, 1
        %s125 = smul.addr %s124, 4
        %s126 = smul.addr %s125, 8
        %s127 = scalar_lea.vmem %s1, %s126
        %p128 = pneg %p58
        %p129 = pneg %p55
        %p130 = pneg %p84
        %p131 = pneg %p81
        %s132 = sand.u32 %s71, 1
        %s133 = scalar_lea.sflag [#allocation3], %s132
        %s134 = sand.u32 %s71, 1
        %s135 = smul.addr %s134, 32
        %s136 = scalar_lea.vmem [#allocation2], %s135
        %p137 = scmp.lt.s32.totalorder %s16, 1
        %s138 = scalar_select %p137, %s16, 1
        %s139 = smul.addr %s138, 4
        %s140 = smul.addr %s139, 8
        %s141 = scalar_lea.vmem %s1, %s140
        %v142 = vld [vmem:[%s141] sm:$0xff]
        %v143 = vld [vmem:[%s141 + $0x8] sm:$0xff]
        %v144 = vld [vmem:[%s141 + $0x10] sm:$0xff]
        %v145 = vld [vmem:[%s141 + $0x18] sm:$0xff]
        %v146 = vld [vmem:[%s0] sm:$0xff]
        %v147 = vld [vmem:[%s0 + $0x8] sm:$0xff]
        %v148 = vld [vmem:[%s0 + $0x10] sm:$0xff]
        %v149 = vld [vmem:[%s0 + $0x18] sm:$0xff]
        %v150 = vld [vmem:[%s0 + $0x20] sm:$0xff]
        %v151 = vld [vmem:[%s0 + $0x28] sm:$0xff]
        %v152 = vld [vmem:[%s0 + $0x30] sm:$0xff]
        %v153 = vld [vmem:[%s0 + $0x38] sm:$0xff]
        %v154 = vld [vmem:[%s0 + $0x40] sm:$0xff]
        %v155 = vld [vmem:[%s0 + $0x48] sm:$0xff]
        %v156 = vld [vmem:[%s0 + $0x50] sm:$0xff]
        %v157 = vld [vmem:[%s0 + $0x58] sm:$0xff]
        %v158 = vld [vmem:[%s0 + $0x60] sm:$0xff]
        %v159 = vld [vmem:[%s0 + $0x68] sm:$0xff]
        %v160 = vld [vmem:[%s0 + $0x70] sm:$0xff]
        %v161 = vld [vmem:[%s0 + $0x78] sm:$0xff]
        %v162 = vld [vmem:[%s0 + $0x80] sm:$0xff]
        %v163 = vld [vmem:[%s0 + $0x88] sm:$0xff]
        %v164 = vld [vmem:[%s0 + $0x90] sm:$0xff]
        %v165 = vld [vmem:[%s0 + $0x98] sm:$0xff]
        %v166 = vld [vmem:[%s0 + $0xa0] sm:$0xff]
        %v167 = vld [vmem:[%s0 + $0xa8] sm:$0xff]
        %v168 = vld [vmem:[%s0 + $0xb0] sm:$0xff]
        %v169 = vld [vmem:[%s0 + $0xb8] sm:$0xff]
        %v170 = vld [vmem:[%s0 + $0xc0] sm:$0xff]
        %v171 = vld [vmem:[%s0 + $0xc8] sm:$0xff]
        %v172 = vld [vmem:[%s0 + $0xd0] sm:$0xff]
        %v173 = vld [vmem:[%s0 + $0xd8] sm:$0xff]
        %v174 = vld [vmem:[%s0 + $0xe0] sm:$0xff]
        %v175 = vld [vmem:[%s0 + $0xe8] sm:$0xff]
        %v176 = vld [vmem:[%s0 + $0xf0] sm:$0xff]
        %v177 = vld [vmem:[%s0 + $0xf8] sm:$0xff]
        %178 = vmatprep.subr.mxu0 0.0
        %v179 = vand.u32 %v146, 4294901760
        %180 = vmatpush1.msra.mxu0 %v179
        %181 = vmatprep.subr.mxu0 0.0
        %v182 = vand.u32 %v147, 4294901760
        %183 = vmatpush1.msra.mxu0 %v182
        %184 = vmatprep.subr.mxu0 0.0
        %v185 = vand.u32 %v148, 4294901760
        %186 = vmatpush1.msra.mxu0 %v185
        %187 = vmatprep.subr.mxu0 0.0
        %v188 = vand.u32 %v149, 4294901760
        %189 = vmatpush1.msra.mxu0 %v188
        %190 = vmatprep.subr.mxu0 0.0
        %v191 = vand.u32 %v150, 4294901760
        %192 = vmatpush1.msra.mxu0 %v191
        %193 = vmatprep.subr.mxu0 0.0
        %v194 = vand.u32 %v151, 4294901760
        %195 = vmatpush1.msra.mxu0 %v194
        %196 = vmatprep.subr.mxu0 0.0
        %v197 = vand.u32 %v152, 4294901760
        %198 = vmatpush1.msra.mxu0 %v197
        %199 = vmatprep.subr.mxu0 0.0
        %v200 = vand.u32 %v153, 4294901760
        %201 = vmatpush1.msra.mxu0 %v200
        %202 = vmatprep.subr.mxu0 0.0
        %v203 = vand.u32 %v154, 4294901760
        %204 = vmatpush1.msra.mxu0 %v203
        %205 = vmatprep.subr.mxu0 0.0
        %v206 = vand.u32 %v155, 4294901760
        %207 = vmatpush1.msra.mxu0 %v206
        %208 = vmatprep.subr.mxu0 0.0
        %v209 = vand.u32 %v156, 4294901760
        %210 = vmatpush1.msra.mxu0 %v209
        %211 = vmatprep.subr.mxu0 0.0
        %v212 = vand.u32 %v157, 4294901760
        %213 = vmatpush1.msra.mxu0 %v212
        %214 = vmatprep.subr.mxu0 0.0
        %v215 = vand.u32 %v158, 4294901760
        %216 = vmatpush1.msra.mxu0 %v215
        %217 = vmatprep.subr.mxu0 0.0
        %v218 = vand.u32 %v159, 4294901760
        %219 = vmatpush1.msra.mxu0 %v218
        %220 = vmatprep.subr.mxu0 0.0
        %v221 = vand.u32 %v160, 4294901760
        %222 = vmatpush1.msra.mxu0 %v221
        %223 = vmatprep.subr.mxu0 0.0
        %v224 = vand.u32 %v161, 4294901760
        %225 = vmatpush1.msra.mxu0 %v224
        %226 = vmatprep.subr.mxu0 0.0
        %v227 = vand.u32 %v162, 4294901760
        %228 = vmatpush1.msra.mxu0 %v227
        %229 = vmatprep.subr.mxu0 0.0
        %v230 = vand.u32 %v163, 4294901760
        %231 = vmatpush1.msra.mxu0 %v230
        %232 = vmatprep.subr.mxu0 0.0
        %v233 = vand.u32 %v164, 4294901760
        %234 = vmatpush1.msra.mxu0 %v233
        %235 = vmatprep.subr.mxu0 0.0
        %v236 = vand.u32 %v165, 4294901760
        %237 = vmatpush1.msra.mxu0 %v236
        %238 = vmatprep.subr.mxu0 0.0
        %v239 = vand.u32 %v166, 4294901760
        %240 = vmatpush1.msra.mxu0 %v239
        %241 = vmatprep.subr.mxu0 0.0
        %v242 = vand.u32 %v167, 4294901760
        %243 = vmatpush1.msra.mxu0 %v242
        %244 = vmatprep.subr.mxu0 0.0
        %v245 = vand.u32 %v168, 4294901760
        %246 = vmatpush1.msra.mxu0 %v245
        %247 = vmatprep.subr.mxu0 0.0
        %v248 = vand.u32 %v169, 4294901760
        %249 = vmatpush1.msra.mxu0 %v248
        %250 = vmatprep.subr.mxu0 0.0
        %v251 = vand.u32 %v170, 4294901760
        %252 = vmatpush1.msra.mxu0 %v251
        %253 = vmatprep.subr.mxu0 0.0
        %v254 = vand.u32 %v171, 4294901760
        %255 = vmatpush1.msra.mxu0 %v254
        %256 = vmatprep.subr.mxu0 0.0
        %v257 = vand.u32 %v172, 4294901760
        %258 = vmatpush1.msra.mxu0 %v257
        %259 = vmatprep.subr.mxu0 0.0
        %v260 = vand.u32 %v173, 4294901760
        %261 = vmatpush1.msra.mxu0 %v260
        %262 = vmatprep.subr.mxu0 0.0
        %v263 = vand.u32 %v174, 4294901760
        %264 = vmatpush1.msra.mxu0 %v263
        %265 = vmatprep.subr.mxu0 0.0
        %v266 = vand.u32 %v175, 4294901760
        %267 = vmatpush1.msra.mxu0 %v266
        %268 = vmatprep.subr.mxu0 0.0
        %v269 = vand.u32 %v176, 4294901760
        %270 = vmatpush1.msra.mxu0 %v269
        %271 = vmatprep.subr.mxu0 0.0
        %v272 = vand.u32 %v177, 4294901760
        %273 = vmatpush1.msra.mxu0 %v272
        %v274 = vand.u32 %v143, 4294901760
        %v275 = vsub.f32 %v143, %v274
        %v276 = vand.u32 %v275, 4294901760
        %v277 = vsub.f32 %v275, %v276
        %v278 = vand.u32 %v277, 4294901760
        %279 = vmatprep.mubr.f32.mxu0 %v278
        %v280 = vand.u32 %v142, 4294901760
        %v281 = vsub.f32 %v142, %v280
        %v282 = vand.u32 %v281, 4294901760
        %v283 = vsub.f32 %v281, %v282
        %v284 = vand.u32 %v283, 4294901760
        %285 = vmatmul.mubr.f32.gmra.mrb[0].mxu0 %v284
        %v286 = vpop.f32.mrb[0].mxu0
        %v287 = vadd.f32 0.0, %v286
        %v288 = vpop.f32.mrb[0].mxu0
        %v289 = vand.u32 %v145, 4294901760
        %v290 = vsub.f32 %v145, %v289
        %v291 = vand.u32 %v290, 4294901760
        %v292 = vsub.f32 %v290, %v291
        %v293 = vand.u32 %v292, 4294901760
        %294 = vmatprep.mubr.f32.mxu0 %v293
        %v295 = vand.u32 %v144, 4294901760
        %v296 = vsub.f32 %v144, %v295
        %v297 = vand.u32 %v296, 4294901760
        %v298 = vsub.f32 %v296, %v297
        %v299 = vand.u32 %v298, 4294901760
        %300 = vmatmul.mubr.f32.gmra.mrb[0].mxu0 %v299
        %v301 = vpop.f32.mrb[0].mxu0
        %v302 = vadd.f32 0.0, %v301
        %v303 = vpop.f32.mrb[0].mxu0
        %304 = vdwg.mxu0
        %305 = vmatprep.subr.mxu0 0.0
        %v306 = vand.u32 %v146, 4294901760
        %v307 = vsub.f32 %v146, %v306
        %v308 = vand.u32 %v307, 4294901760
        %v309 = vsub.f32 %v307, %v308
        %v310 = vand.u32 %v309, 4294901760
        %311 = vmatpush1.msra.mxu0 %v310
        %312 = vmatprep.subr.mxu0 0.0
        %v313 = vand.u32 %v147, 4294901760
        %v314 = vsub.f32 %v147, %v313
        %v315 = vand.u32 %v314, 4294901760
        %v316 = vsub.f32 %v314, %v315
        %v317 = vand.u32 %v316, 4294901760
        %318 = vmatpush1.msra.mxu0 %v317
        %319 = vmatprep.subr.mxu0 0.0
        %v320 = vand.u32 %v148, 4294901760
        %v321 = vsub.f32 %v148, %v320
        %v322 = vand.u32 %v321, 4294901760
        %v323 = vsub.f32 %v321, %v322
        %v324 = vand.u32 %v323, 4294901760
        %325 = vmatpush1.msra.mxu0 %v324
        %326 = vmatprep.subr.mxu0 0.0
        %v327 = vand.u32 %v149, 4294901760
        %v328 = vsub.f32 %v149, %v327
        %v329 = vand.u32 %v328, 4294901760
        %v330 = vsub.f32 %v328, %v329
        %v331 = vand.u32 %v330, 4294901760
        %332 = vmatpush1.msra.mxu0 %v331
        %333 = vmatprep.subr.mxu0 0.0
        %v334 = vand.u32 %v150, 4294901760
        %v335 = vsub.f32 %v150, %v334
        %v336 = vand.u32 %v335, 4294901760
        %v337 = vsub.f32 %v335, %v336
        %v338 = vand.u32 %v337, 4294901760
        %339 = vmatpush1.msra.mxu0 %v338
        %340 = vmatprep.subr.mxu0 0.0
        %v341 = vand.u32 %v151, 4294901760
        %v342 = vsub.f32 %v151, %v341
        %v343 = vand.u32 %v342, 4294901760
        %v344 = vsub.f32 %v342, %v343
        %v345 = vand.u32 %v344, 4294901760
        %346 = vmatpush1.msra.mxu0 %v345
        %347 = vmatprep.subr.mxu0 0.0
        %v348 = vand.u32 %v152, 4294901760
        %v349 = vsub.f32 %v152, %v348
        %v350 = vand.u32 %v349, 4294901760
        %v351 = vsub.f32 %v349, %v350
        %v352 = vand.u32 %v351, 4294901760
        %353 = vmatpush1.msra.mxu0 %v352
        %354 = vmatprep.subr.mxu0 0.0
        %v355 = vand.u32 %v153, 4294901760
        %v356 = vsub.f32 %v153, %v355
        %v357 = vand.u32 %v356, 4294901760
        %v358 = vsub.f32 %v356, %v357
        %v359 = vand.u32 %v358, 4294901760
        %360 = vmatpush1.msra.mxu0 %v359
        %361 = vmatprep.subr.mxu0 0.0
        %v362 = vand.u32 %v154, 4294901760
        %v363 = vsub.f32 %v154, %v362
        %v364 = vand.u32 %v363, 4294901760
        %v365 = vsub.f32 %v363, %v364
        %v366 = vand.u32 %v365, 4294901760
        %367 = vmatpush1.msra.mxu0 %v366
        %368 = vmatprep.subr.mxu0 0.0
        %v369 = vand.u32 %v155, 4294901760
        %v370 = vsub.f32 %v155, %v369
        %v371 = vand.u32 %v370, 4294901760
        %v372 = vsub.f32 %v370, %v371
        %v373 = vand.u32 %v372, 4294901760
        %374 = vmatpush1.msra.mxu0 %v373
        %375 = vmatprep.subr.mxu0 0.0
        %v376 = vand.u32 %v156, 4294901760
        %v377 = vsub.f32 %v156, %v376
        %v378 = vand.u32 %v377, 4294901760
        %v379 = vsub.f32 %v377, %v378
        %v380 = vand.u32 %v379, 4294901760
        %381 = vmatpush1.msra.mxu0 %v380
        %382 = vmatprep.subr.mxu0 0.0
        %v383 = vand.u32 %v157, 4294901760
        %v384 = vsub.f32 %v157, %v383
        %v385 = vand.u32 %v384, 4294901760
        %v386 = vsub.f32 %v384, %v385
        %v387 = vand.u32 %v386, 4294901760
        %388 = vmatpush1.msra.mxu0 %v387
        %389 = vmatprep.subr.mxu0 0.0
        %v390 = vand.u32 %v158, 4294901760
        %v391 = vsub.f32 %v158, %v390
        %v392 = vand.u32 %v391, 4294901760
        %v393 = vsub.f32 %v391, %v392
        %v394 = vand.u32 %v393, 4294901760
        %395 = vmatpush1.msra.mxu0 %v394
        %396 = vmatprep.subr.mxu0 0.0
        %v397 = vand.u32 %v159, 4294901760
        %v398 = vsub.f32 %v159, %v397
        %v399 = vand.u32 %v398, 4294901760
        %v400 = vsub.f32 %v398, %v399
        %v401 = vand.u32 %v400, 4294901760
        %402 = vmatpush1.msra.mxu0 %v401
        %403 = vmatprep.subr.mxu0 0.0
        %v404 = vand.u32 %v160, 4294901760
        %v405 = vsub.f32 %v160, %v404
        %v406 = vand.u32 %v405, 4294901760
        %v407 = vsub.f32 %v405, %v406
        %v408 = vand.u32 %v407, 4294901760
        %409 = vmatpush1.msra.mxu0 %v408
        %410 = vmatprep.subr.mxu0 0.0
        %v411 = vand.u32 %v161, 4294901760
        %v412 = vsub.f32 %v161, %v411
        %v413 = vand.u32 %v412, 4294901760
        %v414 = vsub.f32 %v412, %v413
        %v415 = vand.u32 %v414, 4294901760
        %416 = vmatpush1.msra.mxu0 %v415
        %417 = vmatprep.subr.mxu0 0.0
        %v418 = vand.u32 %v162, 4294901760
        %v419 = vsub.f32 %v162, %v418
        %v420 = vand.u32 %v419, 4294901760
        %v421 = vsub.f32 %v419, %v420
        %v422 = vand.u32 %v421, 4294901760
        %423 = vmatpush1.msra.mxu0 %v422
        %424 = vmatprep.subr.mxu0 0.0
        %v425 = vand.u32 %v163, 4294901760
        %v426 = vsub.f32 %v163, %v425
        %v427 = vand.u32 %v426, 4294901760
        %v428 = vsub.f32 %v426, %v427
        %v429 = vand.u32 %v428, 4294901760
        %430 = vmatpush1.msra.mxu0 %v429
        %431 = vmatprep.subr.mxu0 0.0
        %v432 = vand.u32 %v164, 4294901760
        %v433 = vsub.f32 %v164, %v432
        %v434 = vand.u32 %v433, 4294901760
        %v435 = vsub.f32 %v433, %v434
        %v436 = vand.u32 %v435, 4294901760
        %437 = vmatpush1.msra.mxu0 %v436
        %438 = vmatprep.subr.mxu0 0.0
        %v439 = vand.u32 %v165, 4294901760
        %v440 = vsub.f32 %v165, %v439
        %v441 = vand.u32 %v440, 4294901760
        %v442 = vsub.f32 %v440, %v441
        %v443 = vand.u32 %v442, 4294901760
        %444 = vmatpush1.msra.mxu0 %v443
        %445 = vmatprep.subr.mxu0 0.0
        %v446 = vand.u32 %v166, 4294901760
        %v447 = vsub.f32 %v166, %v446
        %v448 = vand.u32 %v447, 4294901760
        %v449 = vsub.f32 %v447, %v448
        %v450 = vand.u32 %v449, 4294901760
        %451 = vmatpush1.msra.mxu0 %v450
        %452 = vmatprep.subr.mxu0 0.0
        %v453 = vand.u32 %v167, 4294901760
        %v454 = vsub.f32 %v167, %v453
        %v455 = vand.u32 %v454, 4294901760
        %v456 = vsub.f32 %v454, %v455
        %v457 = vand.u32 %v456, 4294901760
        %458 = vmatpush1.msra.mxu0 %v457
        %459 = vmatprep.subr.mxu0 0.0
        %v460 = vand.u32 %v168, 4294901760
        %v461 = vsub.f32 %v168, %v460
        %v462 = vand.u32 %v461, 4294901760
        %v463 = vsub.f32 %v461, %v462
        %v464 = vand.u32 %v463, 4294901760
        %465 = vmatpush1.msra.mxu0 %v464
        %466 = vmatprep.subr.mxu0 0.0
        %v467 = vand.u32 %v169, 4294901760
        %v468 = vsub.f32 %v169, %v467
        %v469 = vand.u32 %v468, 4294901760
        %v470 = vsub.f32 %v468, %v469
        %v471 = vand.u32 %v470, 4294901760
        %472 = vmatpush1.msra.mxu0 %v471
        %473 = vmatprep.subr.mxu0 0.0
        %v474 = vand.u32 %v170, 4294901760
        %v475 = vsub.f32 %v170, %v474
        %v476 = vand.u32 %v475, 4294901760
        %v477 = vsub.f32 %v475, %v476
        %v478 = vand.u32 %v477, 4294901760
        %479 = vmatpush1.msra.mxu0 %v478
        %480 = vmatprep.subr.mxu0 0.0
        %v481 = vand.u32 %v171, 4294901760
        %v482 = vsub.f32 %v171, %v481
        %v483 = vand.u32 %v482, 4294901760
        %v484 = vsub.f32 %v482, %v483
        %v485 = vand.u32 %v484, 4294901760
        %486 = vmatpush1.msra.mxu0 %v485
        %487 = vmatprep.subr.mxu0 0.0
        %v488 = vand.u32 %v172, 4294901760
        %v489 = vsub.f32 %v172, %v488
        %v490 = vand.u32 %v489, 4294901760
        %v491 = vsub.f32 %v489, %v490
        %v492 = vand.u32 %v491, 4294901760
        %493 = vmatpush1.msra.mxu0 %v492
        %494 = vmatprep.subr.mxu0 0.0
        %v495 = vand.u32 %v173, 4294901760
        %v496 = vsub.f32 %v173, %v495
        %v497 = vand.u32 %v496, 4294901760
        %v498 = vsub.f32 %v496, %v497
        %v499 = vand.u32 %v498, 4294901760
        %500 = vmatpush1.msra.mxu0 %v499
        %501 = vmatprep.subr.mxu0 0.0
        %v502 = vand.u32 %v174, 4294901760
        %v503 = vsub.f32 %v174, %v502
        %v504 = vand.u32 %v503, 4294901760
        %v505 = vsub.f32 %v503, %v504
        %v506 = vand.u32 %v505, 4294901760
        %507 = vmatpush1.msra.mxu0 %v506
        %508 = vmatprep.subr.mxu0 0.0
        %v509 = vand.u32 %v175, 4294901760
        %v510 = vsub.f32 %v175, %v509
        %v511 = vand.u32 %v510, 4294901760
        %v512 = vsub.f32 %v510, %v511
        %v513 = vand.u32 %v512, 4294901760
        %514 = vmatpush1.msra.mxu0 %v513
        %515 = vmatprep.subr.mxu0 0.0
        %v516 = vand.u32 %v176, 4294901760
        %v517 = vsub.f32 %v176, %v516
        %v518 = vand.u32 %v517, 4294901760
        %v519 = vsub.f32 %v517, %v518
        %v520 = vand.u32 %v519, 4294901760
        %521 = vmatpush1.msra.mxu0 %v520
        %522 = vmatprep.subr.mxu0 0.0
        %v523 = vand.u32 %v177, 4294901760
        %v524 = vsub.f32 %v177, %v523
        %v525 = vand.u32 %v524, 4294901760
        %v526 = vsub.f32 %v524, %v525
        %v527 = vand.u32 %v526, 4294901760
        %528 = vmatpush1.msra.mxu0 %v527
        %v529 = vand.u32 %v143, 4294901760
        %530 = vmatprep.mubr.f32.mxu0 %v529
        %v531 = vand.u32 %v142, 4294901760
        %532 = vmatmul.mubr.f32.gmra.mrb[0].mxu0 %v531
        %v533 = vpop.f32.mrb[0].mxu0
        %v534 = vadd.f32 %v287, %v533
        %v535 = vpop.f32.mrb[0].mxu0
        %v536 = vand.u32 %v145, 4294901760
        %537 = vmatprep.mubr.f32.mxu0 %v536
        %v538 = vand.u32 %v144, 4294901760
        %539 = vmatmul.mubr.f32.gmra.mrb[0].mxu0 %v538
        %v540 = vpop.f32.mrb[0].mxu0
        %v541 = vadd.f32 %v302, %v540
        %v542 = vpop.f32.mrb[0].mxu0
        %543 = vdwg.mxu0
        %544 = vmatprep.subr.mxu0 0.0
        %v545 = vand.u32 %v146, 4294901760
        %v546 = vsub.f32 %v146, %v545
        %547 = vmatpush1.msra.mxu0 %v546
        %548 = vmatprep.subr.mxu0 0.0
        %v549 = vand.u32 %v147, 4294901760
        %v550 = vsub.f32 %v147, %v549
        %551 = vmatpush1.msra.mxu0 %v550
        %552 = vmatprep.subr.mxu0 0.0
        %v553 = vand.u32 %v148, 4294901760
        %v554 = vsub.f32 %v148, %v553
        %555 = vmatpush1.msra.mxu0 %v554
        %556 = vmatprep.subr.mxu0 0.0
        %v557 = vand.u32 %v149, 4294901760
        %v558 = vsub.f32 %v149, %v557
        %559 = vmatpush1.msra.mxu0 %v558
        %560 = vmatprep.subr.mxu0 0.0
        %v561 = vand.u32 %v150, 4294901760
        %v562 = vsub.f32 %v150, %v561
        %563 = vmatpush1.msra.mxu0 %v562
        %564 = vmatprep.subr.mxu0 0.0
        %v565 = vand.u32 %v151, 4294901760
        %v566 = vsub.f32 %v151, %v565
        %567 = vmatpush1.msra.mxu0 %v566
        %568 = vmatprep.subr.mxu0 0.0
        %v569 = vand.u32 %v152, 4294901760
        %v570 = vsub.f32 %v152, %v569
        %571 = vmatpush1.msra.mxu0 %v570
        %572 = vmatprep.subr.mxu0 0.0
        %v573 = vand.u32 %v153, 4294901760
        %v574 = vsub.f32 %v153, %v573
        %575 = vmatpush1.msra.mxu0 %v574
        %576 = vmatprep.subr.mxu0 0.0
        %v577 = vand.u32 %v154, 4294901760
        %v578 = vsub.f32 %v154, %v577
        %579 = vmatpush1.msra.mxu0 %v578
        %580 = vmatprep.subr.mxu0 0.0
        %v581 = vand.u32 %v155, 4294901760
        %v582 = vsub.f32 %v155, %v581
        %583 = vmatpush1.msra.mxu0 %v582
        %584 = vmatprep.subr.mxu0 0.0
        %v585 = vand.u32 %v156, 4294901760
        %v586 = vsub.f32 %v156, %v585
        %587 = vmatpush1.msra.mxu0 %v586
        %588 = vmatprep.subr.mxu0 0.0
        %v589 = vand.u32 %v157, 4294901760
        %v590 = vsub.f32 %v157, %v589
        %591 = vmatpush1.msra.mxu0 %v590
        %592 = vmatprep.subr.mxu0 0.0
        %v593 = vand.u32 %v158, 4294901760
        %v594 = vsub.f32 %v158, %v593
        %595 = vmatpush1.msra.mxu0 %v594
        %596 = vmatprep.subr.mxu0 0.0
        %v597 = vand.u32 %v159, 4294901760
        %v598 = vsub.f32 %v159, %v597
        %599 = vmatpush1.msra.mxu0 %v598
        %600 = vmatprep.subr.mxu0 0.0
        %v601 = vand.u32 %v160, 4294901760
        %v602 = vsub.f32 %v160, %v601
        %603 = vmatpush1.msra.mxu0 %v602
        %604 = vmatprep.subr.mxu0 0.0
        %v605 = vand.u32 %v161, 4294901760
        %v606 = vsub.f32 %v161, %v605
        %607 = vmatpush1.msra.mxu0 %v606
        %608 = vmatprep.subr.mxu0 0.0
        %v609 = vand.u32 %v162, 4294901760
        %v610 = vsub.f32 %v162, %v609
        %611 = vmatpush1.msra.mxu0 %v610
        %612 = vmatprep.subr.mxu0 0.0
        %v613 = vand.u32 %v163, 4294901760
        %v614 = vsub.f32 %v163, %v613
        %615 = vmatpush1.msra.mxu0 %v614
        %616 = vmatprep.subr.mxu0 0.0
        %v617 = vand.u32 %v164, 4294901760
        %v618 = vsub.f32 %v164, %v617
        %619 = vmatpush1.msra.mxu0 %v618
        %620 = vmatprep.subr.mxu0 0.0
        %v621 = vand.u32 %v165, 4294901760
        %v622 = vsub.f32 %v165, %v621
        %623 = vmatpush1.msra.mxu0 %v622
        %624 = vmatprep.subr.mxu0 0.0
        %v625 = vand.u32 %v166, 4294901760
        %v626 = vsub.f32 %v166, %v625
        %627 = vmatpush1.msra.mxu0 %v626
        %628 = vmatprep.subr.mxu0 0.0
        %v629 = vand.u32 %v167, 4294901760
        %v630 = vsub.f32 %v167, %v629
        %631 = vmatpush1.msra.mxu0 %v630
        %632 = vmatprep.subr.mxu0 0.0
        %v633 = vand.u32 %v168, 4294901760
        %v634 = vsub.f32 %v168, %v633
        %635 = vmatpush1.msra.mxu0 %v634
        %636 = vmatprep.subr.mxu0 0.0
        %v637 = vand.u32 %v169, 4294901760
        %v638 = vsub.f32 %v169, %v637
        %639 = vmatpush1.msra.mxu0 %v638
        %640 = vmatprep.subr.mxu0 0.0
        %v641 = vand.u32 %v170, 4294901760
        %v642 = vsub.f32 %v170, %v641
        %643 = vmatpush1.msra.mxu0 %v642
        %644 = vmatprep.subr.mxu0 0.0
        %v645 = vand.u32 %v171, 4294901760
        %v646 = vsub.f32 %v171, %v645
        %647 = vmatpush1.msra.mxu0 %v646
        %648 = vmatprep.subr.mxu0 0.0
        %v649 = vand.u32 %v172, 4294901760
        %v650 = vsub.f32 %v172, %v649
        %651 = vmatpush1.msra.mxu0 %v650
        %652 = vmatprep.subr.mxu0 0.0
        %v653 = vand.u32 %v173, 4294901760
        %v654 = vsub.f32 %v173, %v653
        %655 = vmatpush1.msra.mxu0 %v654
        %656 = vmatprep.subr.mxu0 0.0
        %v657 = vand.u32 %v174, 4294901760
        %v658 = vsub.f32 %v174, %v657
        %659 = vmatpush1.msra.mxu0 %v658
        %660 = vmatprep.subr.mxu0 0.0
        %v661 = vand.u32 %v175, 4294901760
        %v662 = vsub.f32 %v175, %v661
        %663 = vmatpush1.msra.mxu0 %v662
        %664 = vmatprep.subr.mxu0 0.0
        %v665 = vand.u32 %v176, 4294901760
        %v666 = vsub.f32 %v176, %v665
        %667 = vmatpush1.msra.mxu0 %v666
        %668 = vmatprep.subr.mxu0 0.0
        %v669 = vand.u32 %v177, 4294901760
        %v670 = vsub.f32 %v177, %v669
        %671 = vmatpush1.msra.mxu0 %v670
        %v672 = vand.u32 %v143, 4294901760
        %v673 = vsub.f32 %v143, %v672
        %674 = vmatprep.mubr.f32.mxu0 %v673
        %v675 = vand.u32 %v142, 4294901760
        %v676 = vsub.f32 %v142, %v675
        %677 = vmatmul.mubr.f32.gmra.mrb[0].mxu0 %v676
        %v678 = vpop.f32.mrb[0].mxu0
        %v679 = vadd.f32 %v534, %v678
        %v680 = vpop.f32.mrb[0].mxu0
        %v681 = vand.u32 %v145, 4294901760
        %v682 = vsub.f32 %v145, %v681
        %683 = vmatprep.mubr.f32.mxu0 %v682
        %v684 = vand.u32 %v144, 4294901760
        %v685 = vsub.f32 %v144, %v684
        %686 = vmatmul.mubr.f32.gmra.mrb[0].mxu0 %v685
        %v687 = vpop.f32.mrb[0].mxu0
        %v688 = vadd.f32 %v541, %v687
        %v689 = vpop.f32.mrb[0].mxu0
        %690 = vdwg.mxu0
        %691 = vmatprep.subr.mxu0 0.0
        %v692 = vand.u32 %v146, 4294901760
        %693 = vmatpush1.msra.mxu0 %v692
        %694 = vmatprep.subr.mxu0 0.0
        %v695 = vand.u32 %v147, 4294901760
        %696 = vmatpush1.msra.mxu0 %v695
        %697 = vmatprep.subr.mxu0 0.0
        %v698 = vand.u32 %v148, 4294901760
        %699 = vmatpush1.msra.mxu0 %v698
        %700 = vmatprep.subr.mxu0 0.0
        %v701 = vand.u32 %v149, 4294901760
        %702 = vmatpush1.msra.mxu0 %v701
        %703 = vmatprep.subr.mxu0 0.0
        %v704 = vand.u32 %v150, 4294901760
        %705 = vmatpush1.msra.mxu0 %v704
        %706 = vmatprep.subr.mxu0 0.0
        %v707 = vand.u32 %v151, 4294901760
        %708 = vmatpush1.msra.mxu0 %v707
        %709 = vmatprep.subr.mxu0 0.0
        %v710 = vand.u32 %v152, 4294901760
        %711 = vmatpush1.msra.mxu0 %v710
        %712 = vmatprep.subr.mxu0 0.0
        %v713 = vand.u32 %v153, 4294901760
        %714 = vmatpush1.msra.mxu0 %v713
        %715 = vmatprep.subr.mxu0 0.0
        %v716 = vand.u32 %v154, 4294901760
        %717 = vmatpush1.msra.mxu0 %v716
        %718 = vmatprep.subr.mxu0 0.0
        %v719 = vand.u32 %v155, 4294901760
        %720 = vmatpush1.msra.mxu0 %v719
        %721 = vmatprep.subr.mxu0 0.0
        %v722 = vand.u32 %v156, 4294901760
        %723 = vmatpush1.msra.mxu0 %v722
        %724 = vmatprep.subr.mxu0 0.0
        %v725 = vand.u32 %v157, 4294901760
        %726 = vmatpush1.msra.mxu0 %v725
        %727 = vmatprep.subr.mxu0 0.0
        %v728 = vand.u32 %v158, 4294901760
        %729 = vmatpush1.msra.mxu0 %v728
        %730 = vmatprep.subr.mxu0 0.0
        %v731 = vand.u32 %v159, 4294901760
        %732 = vmatpush1.msra.mxu0 %v731
        %733 = vmatprep.subr.mxu0 0.0
        %v734 = vand.u32 %v160, 4294901760
        %735 = vmatpush1.msra.mxu0 %v734
        %736 = vmatprep.subr.mxu0 0.0
        %v737 = vand.u32 %v161, 4294901760
        %738 = vmatpush1.msra.mxu0 %v737
        %739 = vmatprep.subr.mxu0 0.0
        %v740 = vand.u32 %v162, 4294901760
        %741 = vmatpush1.msra.mxu0 %v740
        %742 = vmatprep.subr.mxu0 0.0
        %v743 = vand.u32 %v163, 4294901760
        %744 = vmatpush1.msra.mxu0 %v743
        %745 = vmatprep.subr.mxu0 0.0
        %v746 = vand.u32 %v164, 4294901760
        %747 = vmatpush1.msra.mxu0 %v746
        %748 = vmatprep.subr.mxu0 0.0
        %v749 = vand.u32 %v165, 4294901760
        %750 = vmatpush1.msra.mxu0 %v749
        %751 = vmatprep.subr.mxu0 0.0
        %v752 = vand.u32 %v166, 4294901760
        %753 = vmatpush1.msra.mxu0 %v752
        %754 = vmatprep.subr.mxu0 0.0
        %v755 = vand.u32 %v167, 4294901760
        %756 = vmatpush1.msra.mxu0 %v755
        %757 = vmatprep.subr.mxu0 0.0
        %v758 = vand.u32 %v168, 4294901760
        %759 = vmatpush1.msra.mxu0 %v758
        %760 = vmatprep.subr.mxu0 0.0
        %v761 = vand.u32 %v169, 4294901760
        %762 = vmatpush1.msra.mxu0 %v761
        %763 = vmatprep.subr.mxu0 0.0
        %v764 = vand.u32 %v170, 4294901760
        %765 = vmatpush1.msra.mxu0 %v764
        %766 = vmatprep.subr.mxu0 0.0
        %v767 = vand.u32 %v171, 4294901760
        %768 = vmatpush1.msra.mxu0 %v767
        %769 = vmatprep.subr.mxu0 0.0
        %v770 = vand.u32 %v172, 4294901760
        %771 = vmatpush1.msra.mxu0 %v770
        %772 = vmatprep.subr.mxu0 0.0
        %v773 = vand.u32 %v173, 4294901760
        %774 = vmatpush1.msra.mxu0 %v773
        %775 = vmatprep.subr.mxu0 0.0
        %v776 = vand.u32 %v174, 4294901760
        %777 = vmatpush1.msra.mxu0 %v776
        %778 = vmatprep.subr.mxu0 0.0
        %v779 = vand.u32 %v175, 4294901760
        %780 = vmatpush1.msra.mxu0 %v779
        %781 = vmatprep.subr.mxu0 0.0
        %v782 = vand.u32 %v176, 4294901760
        %783 = vmatpush1.msra.mxu0 %v782
        %784 = vmatprep.subr.mxu0 0.0
        %v785 = vand.u32 %v177, 4294901760
        %786 = vmatpush1.msra.mxu0 %v785
        %v787 = vand.u32 %v143, 4294901760
        %v788 = vsub.f32 %v143, %v787
        %v789 = vand.u32 %v788, 4294901760
        %790 = vmatprep.mubr.f32.mxu0 %v789
        %v791 = vand.u32 %v142, 4294901760
        %v792 = vsub.f32 %v142, %v791
        %v793 = vand.u32 %v792, 4294901760
        %794 = vmatmul.mubr.f32.gmra.mrb[0].mxu0 %v793
        %v795 = vpop.f32.mrb[0].mxu0
        %v796 = vadd.f32 %v679, %v795
        %v797 = vpop.f32.mrb[0].mxu0
        %v798 = vand.u32 %v145, 4294901760
        %v799 = vsub.f32 %v145, %v798
        %v800 = vand.u32 %v799, 4294901760
        %801 = vmatprep.mubr.f32.mxu0 %v800
        %v802 = vand.u32 %v144, 4294901760
        %v803 = vsub.f32 %v144, %v802
        %v804 = vand.u32 %v803, 4294901760
        %805 = vmatmul.mubr.f32.gmra.mrb[0].mxu0 %v804
        %v806 = vpop.f32.mrb[0].mxu0
        %v807 = vadd.f32 %v688, %v806
        %v808 = vpop.f32.mrb[0].mxu0
        %809 = vdwg.mxu0
        %810 = vmatprep.subr.mxu0 0.0
        %v811 = vand.u32 %v146, 4294901760
        %v812 = vsub.f32 %v146, %v811
        %v813 = vand.u32 %v812, 4294901760
        %814 = vmatpush1.msra.mxu0 %v813
        %815 = vmatprep.subr.mxu0 0.0
        %v816 = vand.u32 %v147, 4294901760
        %v817 = vsub.f32 %v147, %v816
        %v818 = vand.u32 %v817, 4294901760
        %819 = vmatpush1.msra.mxu0 %v818
        %820 = vmatprep.subr.mxu0 0.0
        %v821 = vand.u32 %v148, 4294901760
        %v822 = vsub.f32 %v148, %v821
        %v823 = vand.u32 %v822, 4294901760
        %824 = vmatpush1.msra.mxu0 %v823
        %825 = vmatprep.subr.mxu0 0.0
        %v826 = vand.u32 %v149, 4294901760
        %v827 = vsub.f32 %v149, %v826
        %v828 = vand.u32 %v827, 4294901760
        %829 = vmatpush1.msra.mxu0 %v828
        %830 = vmatprep.subr.mxu0 0.0
        %v831 = vand.u32 %v150, 4294901760
        %v832 = vsub.f32 %v150, %v831
        %v833 = vand.u32 %v832, 4294901760
        %834 = vmatpush1.msra.mxu0 %v833
        %835 = vmatprep.subr.mxu0 0.0
        %v836 = vand.u32 %v151, 4294901760
        %v837 = vsub.f32 %v151, %v836
        %v838 = vand.u32 %v837, 4294901760
        %839 = vmatpush1.msra.mxu0 %v838
        %840 = vmatprep.subr.mxu0 0.0
        %v841 = vand.u32 %v152, 4294901760
        %v842 = vsub.f32 %v152, %v841
        %v843 = vand.u32 %v842, 4294901760
        %844 = vmatpush1.msra.mxu0 %v843
        %845 = vmatprep.subr.mxu0 0.0
        %v846 = vand.u32 %v153, 4294901760
        %v847 = vsub.f32 %v153, %v846
        %v848 = vand.u32 %v847, 4294901760
        %849 = vmatpush1.msra.mxu0 %v848
        %850 = vmatprep.subr.mxu0 0.0
        %v851 = vand.u32 %v154, 4294901760
        %v852 = vsub.f32 %v154, %v851
        %v853 = vand.u32 %v852, 4294901760
        %854 = vmatpush1.msra.mxu0 %v853
        %855 = vmatprep.subr.mxu0 0.0
        %v856 = vand.u32 %v155, 4294901760
        %v857 = vsub.f32 %v155, %v856
        %v858 = vand.u32 %v857, 4294901760
        %859 = vmatpush1.msra.mxu0 %v858
        %860 = vmatprep.subr.mxu0 0.0
        %v861 = vand.u32 %v156, 4294901760
        %v862 = vsub.f32 %v156, %v861
        %v863 = vand.u32 %v862, 4294901760
        %864 = vmatpush1.msra.mxu0 %v863
        %865 = vmatprep.subr.mxu0 0.0
        %v866 = vand.u32 %v157, 4294901760
        %v867 = vsub.f32 %v157, %v866
        %v868 = vand.u32 %v867, 4294901760
        %869 = vmatpush1.msra.mxu0 %v868
        %870 = vmatprep.subr.mxu0 0.0
        %v871 = vand.u32 %v158, 4294901760
        %v872 = vsub.f32 %v158, %v871
        %v873 = vand.u32 %v872, 4294901760
        %874 = vmatpush1.msra.mxu0 %v873
        %875 = vmatprep.subr.mxu0 0.0
        %v876 = vand.u32 %v159, 4294901760
        %v877 = vsub.f32 %v159, %v876
        %v878 = vand.u32 %v877, 4294901760
        %879 = vmatpush1.msra.mxu0 %v878
        %880 = vmatprep.subr.mxu0 0.0
        %v881 = vand.u32 %v160, 4294901760
        %v882 = vsub.f32 %v160, %v881
        %v883 = vand.u32 %v882, 4294901760
        %884 = vmatpush1.msra.mxu0 %v883
        %885 = vmatprep.subr.mxu0 0.0
        %v886 = vand.u32 %v161, 4294901760
        %v887 = vsub.f32 %v161, %v886
        %v888 = vand.u32 %v887, 4294901760
        %889 = vmatpush1.msra.mxu0 %v888
        %890 = vmatprep.subr.mxu0 0.0
        %v891 = vand.u32 %v162, 4294901760
        %v892 = vsub.f32 %v162, %v891
        %v893 = vand.u32 %v892, 4294901760
        %894 = vmatpush1.msra.mxu0 %v893
        %895 = vmatprep.subr.mxu0 0.0
        %v896 = vand.u32 %v163, 4294901760
        %v897 = vsub.f32 %v163, %v896
        %v898 = vand.u32 %v897, 4294901760
        %899 = vmatpush1.msra.mxu0 %v898
        %900 = vmatprep.subr.mxu0 0.0
        %v901 = vand.u32 %v164, 4294901760
        %v902 = vsub.f32 %v164, %v901
        %v903 = vand.u32 %v902, 4294901760
        %904 = vmatpush1.msra.mxu0 %v903
        %905 = vmatprep.subr.mxu0 0.0
        %v906 = vand.u32 %v165, 4294901760
        %v907 = vsub.f32 %v165, %v906
        %v908 = vand.u32 %v907, 4294901760
        %909 = vmatpush1.msra.mxu0 %v908
        %910 = vmatprep.subr.mxu0 0.0
        %v911 = vand.u32 %v166, 4294901760
        %v912 = vsub.f32 %v166, %v911
        %v913 = vand.u32 %v912, 4294901760
        %914 = vmatpush1.msra.mxu0 %v913
        %915 = vmatprep.subr.mxu0 0.0
        %v916 = vand.u32 %v167, 4294901760
        %v917 = vsub.f32 %v167, %v916
        %v918 = vand.u32 %v917, 4294901760
        %919 = vmatpush1.msra.mxu0 %v918
        %920 = vmatprep.subr.mxu0 0.0
        %v921 = vand.u32 %v168, 4294901760
        %v922 = vsub.f32 %v168, %v921
        %v923 = vand.u32 %v922, 4294901760
        %924 = vmatpush1.msra.mxu0 %v923
        %925 = vmatprep.subr.mxu0 0.0
        %v926 = vand.u32 %v169, 4294901760
        %v927 = vsub.f32 %v169, %v926
        %v928 = vand.u32 %v927, 4294901760
        %929 = vmatpush1.msra.mxu0 %v928
        %930 = vmatprep.subr.mxu0 0.0
        %v931 = vand.u32 %v170, 4294901760
        %v932 = vsub.f32 %v170, %v931
        %v933 = vand.u32 %v932, 4294901760
        %934 = vmatpush1.msra.mxu0 %v933
        %935 = vmatprep.subr.mxu0 0.0
        %v936 = vand.u32 %v171, 4294901760
        %v937 = vsub.f32 %v171, %v936
        %v938 = vand.u32 %v937, 4294901760
        %939 = vmatpush1.msra.mxu0 %v938
        %940 = vmatprep.subr.mxu0 0.0
        %v941 = vand.u32 %v172, 4294901760
        %v942 = vsub.f32 %v172, %v941
        %v943 = vand.u32 %v942, 4294901760
        %944 = vmatpush1.msra.mxu0 %v943
        %945 = vmatprep.subr.mxu0 0.0
        %v946 = vand.u32 %v173, 4294901760
        %v947 = vsub.f32 %v173, %v946
        %v948 = vand.u32 %v947, 4294901760
        %949 = vmatpush1.msra.mxu0 %v948
        %950 = vmatprep.subr.mxu0 0.0
        %v951 = vand.u32 %v174, 4294901760
        %v952 = vsub.f32 %v174, %v951
        %v953 = vand.u32 %v952, 4294901760
        %954 = vmatpush1.msra.mxu0 %v953
        %955 = vmatprep.subr.mxu0 0.0
        %v956 = vand.u32 %v175, 4294901760
        %v957 = vsub.f32 %v175, %v956
        %v958 = vand.u32 %v957, 4294901760
        %959 = vmatpush1.msra.mxu0 %v958
        %960 = vmatprep.subr.mxu0 0.0
        %v961 = vand.u32 %v176, 4294901760
        %v962 = vsub.f32 %v176, %v961
        %v963 = vand.u32 %v962, 4294901760
        %964 = vmatpush1.msra.mxu0 %v963
        %965 = vmatprep.subr.mxu0 0.0
        %v966 = vand.u32 %v177, 4294901760
        %v967 = vsub.f32 %v177, %v966
        %v968 = vand.u32 %v967, 4294901760
        %969 = vmatpush1.msra.mxu0 %v968
        %v970 = vand.u32 %v143, 4294901760
        %971 = vmatprep.mubr.f32.mxu0 %v970
        %v972 = vand.u32 %v142, 4294901760
        %973 = vmatmul.mubr.f32.gmra.mrb[0].mxu0 %v972
        %v974 = vpop.f32.mrb[0].mxu0
        %v975 = vadd.f32 %v796, %v974
        %v976 = vpop.f32.mrb[0].mxu0
        %v977 = vand.u32 %v145, 4294901760
        %978 = vmatprep.mubr.f32.mxu0 %v977
        %v979 = vand.u32 %v144, 4294901760
        %980 = vmatmul.mubr.f32.gmra.mrb[0].mxu0 %v979
        %v981 = vpop.f32.mrb[0].mxu0
        %v982 = vadd.f32 %v807, %v981
        %v983 = vpop.f32.mrb[0].mxu0
        %984 = vdwg.mxu0
        %985 = vmatprep.subr.mxu0 0.0
        %v986 = vand.u32 %v146, 4294901760
        %987 = vmatpush1.msra.mxu0 %v986
        %988 = vmatprep.subr.mxu0 0.0
        %v989 = vand.u32 %v147, 4294901760
        %990 = vmatpush1.msra.mxu0 %v989
        %991 = vmatprep.subr.mxu0 0.0
        %v992 = vand.u32 %v148, 4294901760
        %993 = vmatpush1.msra.mxu0 %v992
        %994 = vmatprep.subr.mxu0 0.0
        %v995 = vand.u32 %v149, 4294901760
        %996 = vmatpush1.msra.mxu0 %v995
        %997 = vmatprep.subr.mxu0 0.0
        %v998 = vand.u32 %v150, 4294901760
        %999 = vmatpush1.msra.mxu0 %v998
        %1000 = vmatprep.subr.mxu0 0.0
        %v1001 = vand.u32 %v151, 4294901760
        %1002 = vmatpush1.msra.mxu0 %v1001
        %1003 = vmatprep.subr.mxu0 0.0
        %v1004 = vand.u32 %v152, 4294901760
        %1005 = vmatpush1.msra.mxu0 %v1004
        %1006 = vmatprep.subr.mxu0 0.0
        %v1007 = vand.u32 %v153, 4294901760
        %1008 = vmatpush1.msra.mxu0 %v1007
        %1009 = vmatprep.subr.mxu0 0.0
        %v1010 = vand.u32 %v154, 4294901760
        %1011 = vmatpush1.msra.mxu0 %v1010
        %1012 = vmatprep.subr.mxu0 0.0
        %v1013 = vand.u32 %v155, 4294901760
        %1014 = vmatpush1.msra.mxu0 %v1013
        %1015 = vmatprep.subr.mxu0 0.0
        %v1016 = vand.u32 %v156, 4294901760
        %1017 = vmatpush1.msra.mxu0 %v1016
        %1018 = vmatprep.subr.mxu0 0.0
        %v1019 = vand.u32 %v157, 4294901760
        %1020 = vmatpush1.msra.mxu0 %v1019
        %1021 = vmatprep.subr.mxu0 0.0
        %v1022 = vand.u32 %v158, 4294901760
        %1023 = vmatpush1.msra.mxu0 %v1022
        %1024 = vmatprep.subr.mxu0 0.0
        %v1025 = vand.u32 %v159, 4294901760
        %1026 = vmatpush1.msra.mxu0 %v1025
        %1027 = vmatprep.subr.mxu0 0.0
        %v1028 = vand.u32 %v160, 4294901760
        %1029 = vmatpush1.msra.mxu0 %v1028
        %1030 = vmatprep.subr.mxu0 0.0
        %v1031 = vand.u32 %v161, 4294901760
        %1032 = vmatpush1.msra.mxu0 %v1031
        %1033 = vmatprep.subr.mxu0 0.0
        %v1034 = vand.u32 %v162, 4294901760
        %1035 = vmatpush1.msra.mxu0 %v1034
        %1036 = vmatprep.subr.mxu0 0.0
        %v1037 = vand.u32 %v163, 4294901760
        %1038 = vmatpush1.msra.mxu0 %v1037
        %1039 = vmatprep.subr.mxu0 0.0
        %v1040 = vand.u32 %v164, 4294901760
        %1041 = vmatpush1.msra.mxu0 %v1040
        %1042 = vmatprep.subr.mxu0 0.0
        %v1043 = vand.u32 %v165, 4294901760
        %1044 = vmatpush1.msra.mxu0 %v1043
        %1045 = vmatprep.subr.mxu0 0.0
        %v1046 = vand.u32 %v166, 4294901760
        %1047 = vmatpush1.msra.mxu0 %v1046
        %1048 = vmatprep.subr.mxu0 0.0
        %v1049 = vand.u32 %v167, 4294901760
        %1050 = vmatpush1.msra.mxu0 %v1049
        %1051 = vmatprep.subr.mxu0 0.0
        %v1052 = vand.u32 %v168, 4294901760
        %1053 = vmatpush1.msra.mxu0 %v1052
        %1054 = vmatprep.subr.mxu0 0.0
        %v1055 = vand.u32 %v169, 4294901760
        %1056 = vmatpush1.msra.mxu0 %v1055
        %1057 = vmatprep.subr.mxu0 0.0
        %v1058 = vand.u32 %v170, 4294901760
        %1059 = vmatpush1.msra.mxu0 %v1058
        %1060 = vmatprep.subr.mxu0 0.0
        %v1061 = vand.u32 %v171, 4294901760
        %1062 = vmatpush1.msra.mxu0 %v1061
        %1063 = vmatprep.subr.mxu0 0.0
        %v1064 = vand.u32 %v172, 4294901760
        %1065 = vmatpush1.msra.mxu0 %v1064
        %1066 = vmatprep.subr.mxu0 0.0
        %v1067 = vand.u32 %v173, 4294901760
        %1068 = vmatpush1.msra.mxu0 %v1067
        %1069 = vmatprep.subr.mxu0 0.0
        %v1070 = vand.u32 %v174, 4294901760
        %1071 = vmatpush1.msra.mxu0 %v1070
        %1072 = vmatprep.subr.mxu0 0.0
        %v1073 = vand.u32 %v175, 4294901760
        %1074 = vmatpush1.msra.mxu0 %v1073
        %1075 = vmatprep.subr.mxu0 0.0
        %v1076 = vand.u32 %v176, 4294901760
        %1077 = vmatpush1.msra.mxu0 %v1076
        %1078 = vmatprep.subr.mxu0 0.0
        %v1079 = vand.u32 %v177, 4294901760
        %1080 = vmatpush1.msra.mxu0 %v1079
        %v1081 = vand.u32 %v143, 4294901760
        %1082 = vmatprep.mubr.f32.mxu0 %v1081
        %v1083 = vand.u32 %v142, 4294901760
        %1084 = vmatmul.mubr.f32.gmra.mrb[0].mxu0 %v1083
        %v1085 = vpop.f32.mrb[0].mxu0
        %v1086 = vadd.f32 %v975, %v1085
        %v1087 = vpop.f32.mrb[0].mxu0
        %v1088 = vand.u32 %v145, 4294901760
        %1089 = vmatprep.mubr.f32.mxu0 %v1088
        %v1090 = vand.u32 %v144, 4294901760
        %1091 = vmatmul.mubr.f32.gmra.mrb[0].mxu0 %v1090
        %v1092 = vpop.f32.mrb[0].mxu0
        %v1093 = vadd.f32 %v982, %v1092
        %v1094 = vpop.f32.mrb[0].mxu0
        %1095 = vdwg.mxu0
        %vm1096 = vcmask 523264
        %1097 = vst.msk [vmem:[%s136] sm:$0xff] %vm1096, 0.0
        %1098 = vst.msk [vmem:[%s136 + $0x18] sm:$0xff] %vm1096, 0.0
        %1099 = vst.msk [vmem:[%s136 + $0x8] sm:$0xff] %vm1096, %v1086
        %1100 = vst.msk [vmem:[%s136 + $0x10] sm:$0xff] %vm1096, %v1093
        %s1101 = sand.u32 %s71, 1
        %s1102 = scalar_lea.sflag [#allocation3], %s1101
        %s1103 = sand.u32 %s71, 1
        %s1104 = smul.addr %s1103, 32
        %s1105 = scalar_lea.vmem [#allocation2], %s1104
        // Predicated region
        $region29: #{tpu_custom_call.1} parent=27 // pred_check
          %p1106 = pneg %p81
        $region30: #{tpu_custom_call.1} parent=27 // pred_check_branch
          %1108 = sbr.rel (%p1106) target = $region32
        $region31: #{tpu_custom_call.1} parent=27 // pred_region
          %s1110 = ssub.s32 512, 512
          %1111 = vsyncadd %s1102, %s1110
          %s1112 = smul.addr %s16, 4
          %s1113 = smul.addr %s1112, 128
          %s1114 = scalar_lea.hbm %s2, %s1113
          %s1115 = sshll.u32 %s1105, 4
          %s1116 = int_to_ptr.vmem [resolvable:$true] %s1115
          %1121 = dma.vmem_to_hbm [thread:$0]  %s1116, 512, %s1114, %s1102, 128, 128, 8
        $region32: #{tpu_custom_call.1} parent=27 // pred_fallthru
          _
      $region28: #{tpu_custom_call.1} parent=5 // pred_fallthru
        _
      %p1122 = scmp.le.s32.totalorder 2, %s11
      // Predicated region
      $region33: #{tpu_custom_call.1} parent=5 // pred_check
        %p1123 = pneg %p1122
      $region34: #{tpu_custom_call.1} parent=5 // pred_check_branch
        %1125 = sbr.rel (%p1123) target = $region36
      $region35: #{tpu_custom_call.1} parent=5 // pred_region
        %s1126 = ssub.s32 %s11, 2
        // Predicated region
        $region37: #{tpu_custom_call.1} parent=35 // pred_check
          %p1127 = pneg %p87
        $region38: #{tpu_custom_call.1} parent=35 // pred_check_branch
          %1129 = sbr.rel (%p1127) target = $region40
        $region39: #{tpu_custom_call.1} parent=35 // pred_region
          %s1130 = sand.u32 %s72, 1
          %s1131 = scalar_lea.sflag [#allocation3], %s1130
          %s1132 = sand.u32 %s72, 1
          %s1133 = smul.addr %s1132, 32
          %s1134 = scalar_lea.vmem [#allocation2], %s1133
          %1135 = dma.done %s1131, 512
        $region40: #{tpu_custom_call.1} parent=35 // pred_fallthru
          _
      $region36: #{tpu_custom_call.1} parent=5 // pred_fallthru
        _
    $region6: #{tpu_custom_call.1} parent=1 // loop_footer
      %s15 = sadd.s32 1, %s11
    $region7: #{tpu_custom_call.1} parent=1 // loop_footer_branch
      %10 = sbr.rel target = $region3
    $region8: #{tpu_custom_call.1} parent=1 // loop_exit
      _
    %1136 = vsyncpa [#allocation3], 1
    %s1137 = scalar_lea.sflag [#allocation3], 1
    %1138 = vsyncpa %s1137, 1

</llo_original>
